<compile_context>
chip_gen: v6e
topology: v6e:2x2x1
jax: 0.10.0
libtpu: 0.0.40
codegen_flags: <defaults>
</compile_context>

<pallas_src>
import functools
import math

import jax
import jax.numpy as jnp
from jax.experimental import pallas as pl
from jax.experimental.pallas import tpu as pltpu


def _conv3x3_kernel(x0_ref, x1_ref, x2_ref, mask_ref, w_ref, o_ref):
    """One (batch, row-tile) step of the 3x3 / stride-1 / pad-1 convolution.

    x{0,1,2}_ref: (1, C, TH*W) bf16 - flattened input windows for kh = 0,1,2.
    mask_ref:     (2, TH*W) f32 - [0] zeroes column w == 0, [1] zeroes w == W-1.
    w_ref:        (E, 9*C) bf16 - weights, contraction ordered (kh, kw, c).
    o_ref:        (1, E, TH*W) bf16 - NCHW output tile with (H, W) flattened.
    """
    not_left = mask_ref[0:1, :]      # (1, TH*W); broadcasts over the C sublanes
    not_right = mask_ref[1:2, :]

    def shift_right(v):              # result[n] = v[n - 1]; wrap lands on a masked lane
        return jnp.concatenate([v[:, -1:], v[:, :-1]], axis=1)

    def shift_left(v):               # result[n] = v[n + 1]; wrap lands on a masked lane
        return jnp.concatenate([v[:, 1:], v[:, :1]], axis=1)

    taps = []
    for row_ref in (x0_ref, x1_ref, x2_ref):            # kh = 0, 1, 2
        mid = row_ref[0].astype(jnp.float32)             # (C, TH*W)
        taps.append(shift_right(mid) * not_left)         # kw = 0 -> source col w-1
        taps.append(mid)                                  # kw = 1 -> source col w
        taps.append(shift_left(mid) * not_right)         # kw = 2 -> source col w+1

    # (9C, TH*W) im2col slab; single lane-dense MXU matmul, f32 accumulation.
    col = jnp.concatenate(taps, axis=0).astype(jnp.bfloat16)
    out = jnp.dot(w_ref[...], col, preferred_element_type=jnp.float32)
    o_ref[0] = out.astype(o_ref.dtype)                    # lane-dense (E, TH*W) store


def _choose_tile_rows(H, W, E, out_itemsize, batch, target_bytes=1 << 20):
    """Output rows per grid step: TH*W % 128 == 0, ~1 MiB output tiles, and at
    least ~4 grid steps (2 TensorCores on v7x, x2 for pipelining) if possible."""
    r = 128 // math.gcd(128, W)                    # min rows for lane-dense tiles
    th = max(r, (target_bytes // (E * W * out_itemsize)) // r * r)
    h_ceil = ((H + r - 1) // r) * r
    th = min(th, h_ceil)
    while th > r and batch * ((h_ceil + th - 1) // th) < 4:
        th = max(r, ((th // 2) // r) * r)
    return th


@functools.partial(jax.jit, static_argnames=("out_dtype",))
def overlap_patch_embed(x_nchw, weight_oihw, *, out_dtype=jnp.bfloat16):
    """x_nchw: (B, C, H, W); weight_oihw: (E, C, 3, 3). Returns (B, E, H, W)."""
    B, C, H, W = x_nchw.shape
    E = weight_oihw.shape[0]

    TH = _choose_tile_rows(H, W, E, jnp.dtype(out_dtype).itemsize, B)
    Hp = ((H + TH - 1) // TH) * TH          # output rows padded to the row tile
    THW = TH * W

    # ---- HBM-side layout glue (all over the small C-channel input) ----------
    # Rows zero-padded: 1 on top (conv pad), Hp - H + 1 at the bottom (conv pad
    # + row-tile remainder); cast once to bf16.
    x_pad = jnp.pad(x_nchw, ((0, 0), (0, 0), (1, Hp + 1 - H), (0, 0)))
    x_pad = x_pad.astype(jnp.bfloat16)                     # (B, C, Hp + 2, W)
    # Three row-shifted, spatially flattened copies: tap kh covers padded rows
    # [kh, kh + Hp).  The BlockSpec DMA then delivers contiguous (C, TH*W)
    # windows with W on lanes - no dynamic lane slicing inside the kernel.
    x_taps = [x_pad[:, :, k:k + Hp, :].reshape(B, C, Hp * W) for k in range(3)]

    # Edge masks for the +-1 column taps (lane n of a tile is column n % W).
    wpos = jnp.arange(W, dtype=jnp.int32)
    masks = jnp.stack([wpos != 0, wpos != W - 1]).astype(jnp.float32)  # (2, W)
    masks = jnp.tile(masks, (1, TH))                                   # (2, TH*W)

    # Weights: OIHW -> (E, kh, kw, c) -> (E, 9C) bf16, matching the im2col order.
    w_mat = jnp.transpose(weight_oihw, (0, 2, 3, 1)).reshape(E, 9 * C)
    w_mat = w_mat.astype(jnp.bfloat16)

    tap_spec = pl.BlockSpec((1, C, THW), lambda b, h: (b, 0, h))
    out_flat = pl.pallas_call(
        _conv3x3_kernel,
        out_shape=jax.ShapeDtypeStruct((B, E, Hp * W), out_dtype),
        grid_spec=pltpu.PrefetchScalarGridSpec(
            num_scalar_prefetch=0,
            grid=(B, Hp // TH),
            in_specs=[
                tap_spec, tap_spec, tap_spec,
                pl.BlockSpec((2, THW), lambda b, h: (0, 0)),      # edge masks
                pl.BlockSpec((E, 9 * C), lambda b, h: (0, 0)),    # resident weights
            ],
            out_specs=pl.BlockSpec((1, E, THW), lambda b, h: (b, 0, h)),
        ),
        compiler_params=pltpu.CompilerParams(
            dimension_semantics=("parallel", "parallel"),
        ),
    )(*x_taps, masks, w_mat)

    # Free metadata reshape back to NCHW; strip padded rows only if there are any.
    # TODO(synk): downstream blocks could consume the bf16 (B, E, Hp*W) slab
    # directly and skip this slice when H % TH != 0.
    out = out_flat.reshape(B, E, Hp, W)
    if Hp != H:
        out = out[:, :, :H, :]
    return out


def _reference(x_nchw, weight_oihw):
    return jax.lax.conv_general_dilated(
        x_nchw, weight_oihw,
        window_strides=(1, 1), padding=((1, 1), (1, 1)),
        dimension_numbers=("NCHW", "OIHW", "NCHW"),
        precision=jax.lax.Precision.HIGHEST,
    )


if __name__ == "__main__":
    B, C, H, W = 2, 3, 16, 16
    E = 48  # embed_dim (module default)

    key = jax.random.PRNGKey(0)
    kx, kw = jax.random.split(key)
    x = jax.random.normal(kx, (B, C, H, W), dtype=jnp.float32)
    # Deterministic synthetic Conv2d weight, PyTorch OIHW shape, bias=False.
    weight = jax.random.normal(kw, (E, C, 3, 3), dtype=jnp.float32) * 0.1

    out = jax.block_until_ready(overlap_patch_embed(x, weight))
    ref = _reference(x, weight)

    assert out.shape == (B, E, H, W), out.shape
    # bf16 inputs / weights / output (f32 MXU accumulation) vs the f32 reference.
    err = float(jnp.max(jnp.abs(out.astype(jnp.float32) - ref)))
    assert jnp.allclose(out.astype(jnp.float32), ref, atol=5e-2, rtol=5e-2), err

    print("KERNEL_OK")
</pallas_src>

<mosaic_0001>
module attributes {stable_mosaic.version = 11 : i64} {
  func.func @_conv3x3_kernel(%arg0: i32, %arg1: i32, %arg2: memref<1x3x128xbf16, #tpu.memory_space<vmem>>, %arg3: memref<1x3x128xbf16, #tpu.memory_space<vmem>>, %arg4: memref<1x3x128xbf16, #tpu.memory_space<vmem>>, %arg5: memref<2x128xf32, #tpu.memory_space<vmem>>, %arg6: memref<48x27xbf16, #tpu.memory_space<vmem>>, %arg7: memref<1x48x128xbf16, #tpu.memory_space<vmem>>) attributes {dimension_semantics = [#tpu.dimension_semantics<parallel>, #tpu.dimension_semantics<parallel>], iteration_bounds = array<i64: 2, 2>, scalar_prefetch = 0 : i64, scratch_operands = 0 : i64, tpu.core_type = #tpu.core_type<tc>, window_params = [{transform_indices = @transform_0, window_bounds = array<i64: 1, 3, 128>}, {transform_indices = @transform_1, window_bounds = array<i64: 1, 3, 128>}, {transform_indices = @transform_2, window_bounds = array<i64: 1, 3, 128>}, {pipeline_mode = #tpu.pipeline_mode<synchronous>, transform_indices = @transform_3, window_bounds = array<i64: 2, 128>}, {pipeline_mode = #tpu.pipeline_mode<synchronous>, transform_indices = @transform_4, window_bounds = array<i64: 48, 27>}, {transform_indices = @transform_5, window_bounds = array<i64: 1, 48, 128>}]} {
    %c0 = arith.constant 0 : index
    %c0_0 = arith.constant 0 : index
    %0 = vector.load %arg5[%c0, %c0_0] : memref<2x128xf32, #tpu.memory_space<vmem>>, vector<1x128xf32>
    %c1 = arith.constant 1 : index
    %c0_1 = arith.constant 0 : index
    %1 = vector.load %arg5[%c1, %c0_1] : memref<2x128xf32, #tpu.memory_space<vmem>>, vector<1x128xf32>
    %c0_2 = arith.constant 0 : index
    %c0_3 = arith.constant 0 : index
    %c0_4 = arith.constant 0 : index
    %2 = vector.load %arg2[%c0_2, %c0_3, %c0_4] : memref<1x3x128xbf16, #tpu.memory_space<vmem>>, vector<1x3x128xbf16>
    %3 = vector.shape_cast %2 : vector<1x3x128xbf16> to vector<3x128xbf16>
    %4 = arith.extf %3 : vector<3x128xbf16> to vector<3x128xf32>
    %5 = vector.extract_strided_slice %4 {offsets = [0, 127], sizes = [3, 1], strides = [1, 1]} : vector<3x128xf32> to vector<3x1xf32>
    %6 = vector.extract_strided_slice %4 {offsets = [0, 0], sizes = [3, 127], strides = [1, 1]} : vector<3x128xf32> to vector<3x127xf32>
    %7 = tpu.concatenate %5, %6 in 1 : vector<3x1xf32>, vector<3x127xf32> -> vector<3x128xf32>
    %8 = vector.broadcast %0 : vector<1x128xf32> to vector<3x128xf32>
    %9 = arith.mulf %7, %8 : vector<3x128xf32>
    %10 = vector.extract_strided_slice %4 {offsets = [0, 1], sizes = [3, 127], strides = [1, 1]} : vector<3x128xf32> to vector<3x127xf32>
    %11 = vector.extract_strided_slice %4 {offsets = [0, 0], sizes = [3, 1], strides = [1, 1]} : vector<3x128xf32> to vector<3x1xf32>
    %12 = tpu.concatenate %10, %11 in 1 : vector<3x127xf32>, vector<3x1xf32> -> vector<3x128xf32>
    %13 = vector.broadcast %1 : vector<1x128xf32> to vector<3x128xf32>
    %14 = arith.mulf %12, %13 : vector<3x128xf32>
    %c0_5 = arith.constant 0 : index
    %c0_6 = arith.constant 0 : index
    %c0_7 = arith.constant 0 : index
    %15 = vector.load %arg3[%c0_5, %c0_6, %c0_7] : memref<1x3x128xbf16, #tpu.memory_space<vmem>>, vector<1x3x128xbf16>
    %16 = vector.shape_cast %15 : vector<1x3x128xbf16> to vector<3x128xbf16>
    %17 = arith.extf %16 : vector<3x128xbf16> to vector<3x128xf32>
    %18 = vector.extract_strided_slice %17 {offsets = [0, 127], sizes = [3, 1], strides = [1, 1]} : vector<3x128xf32> to vector<3x1xf32>
    %19 = vector.extract_strided_slice %17 {offsets = [0, 0], sizes = [3, 127], strides = [1, 1]} : vector<3x128xf32> to vector<3x127xf32>
    %20 = tpu.concatenate %18, %19 in 1 : vector<3x1xf32>, vector<3x127xf32> -> vector<3x128xf32>
    %21 = vector.broadcast %0 : vector<1x128xf32> to vector<3x128xf32>
    %22 = arith.mulf %20, %21 : vector<3x128xf32>
    %23 = vector.extract_strided_slice %17 {offsets = [0, 1], sizes = [3, 127], strides = [1, 1]} : vector<3x128xf32> to vector<3x127xf32>
    %24 = vector.extract_strided_slice %17 {offsets = [0, 0], sizes = [3, 1], strides = [1, 1]} : vector<3x128xf32> to vector<3x1xf32>
    %25 = tpu.concatenate %23, %24 in 1 : vector<3x127xf32>, vector<3x1xf32> -> vector<3x128xf32>
    %26 = vector.broadcast %1 : vector<1x128xf32> to vector<3x128xf32>
    %27 = arith.mulf %25, %26 : vector<3x128xf32>
    %c0_8 = arith.constant 0 : index
    %c0_9 = arith.constant 0 : index
    %c0_10 = arith.constant 0 : index
    %28 = vector.load %arg4[%c0_8, %c0_9, %c0_10] : memref<1x3x128xbf16, #tpu.memory_space<vmem>>, vector<1x3x128xbf16>
    %29 = vector.shape_cast %28 : vector<1x3x128xbf16> to vector<3x128xbf16>
    %30 = arith.extf %29 : vector<3x128xbf16> to vector<3x128xf32>
    %31 = vector.extract_strided_slice %30 {offsets = [0, 127], sizes = [3, 1], strides = [1, 1]} : vector<3x128xf32> to vector<3x1xf32>
    %32 = vector.extract_strided_slice %30 {offsets = [0, 0], sizes = [3, 127], strides = [1, 1]} : vector<3x128xf32> to vector<3x127xf32>
    %33 = tpu.concatenate %31, %32 in 1 : vector<3x1xf32>, vector<3x127xf32> -> vector<3x128xf32>
    %34 = vector.broadcast %0 : vector<1x128xf32> to vector<3x128xf32>
    %35 = arith.mulf %33, %34 : vector<3x128xf32>
    %36 = vector.extract_strided_slice %30 {offsets = [0, 1], sizes = [3, 127], strides = [1, 1]} : vector<3x128xf32> to vector<3x127xf32>
    %37 = vector.extract_strided_slice %30 {offsets = [0, 0], sizes = [3, 1], strides = [1, 1]} : vector<3x128xf32> to vector<3x1xf32>
    %38 = tpu.concatenate %36, %37 in 1 : vector<3x127xf32>, vector<3x1xf32> -> vector<3x128xf32>
    %39 = vector.broadcast %1 : vector<1x128xf32> to vector<3x128xf32>
    %40 = arith.mulf %38, %39 : vector<3x128xf32>
    %41 = tpu.concatenate %9, %4, %14, %22, %17, %27, %35, %30, %40 in 0 : vector<3x128xf32>, vector<3x128xf32>, vector<3x128xf32>, vector<3x128xf32>, vector<3x128xf32>, vector<3x128xf32>, vector<3x128xf32>, vector<3x128xf32>, vector<3x128xf32> -> vector<27x128xf32>
    %42 = arith.truncf %41 : vector<27x128xf32> to vector<27x128xbf16>
    %c0_11 = arith.constant 0 : index
    %c0_12 = arith.constant 0 : index
    %43 = vector.load %arg6[%c0_11, %c0_12] : memref<48x27xbf16, #tpu.memory_space<vmem>>, vector<48x27xbf16>
    %cst = arith.constant dense<0.000000e+00> : vector<48x128xf32>
    %44 = tpu.matmul %43, %42, %cst {dimension_numbers = #tpu.dot_dimension_numbers<[1], [0], [0], [1], [0, 0, 1, 1], [], []>} : vector<48x27xbf16>, vector<27x128xbf16>, vector<48x128xf32> -> vector<48x128xf32>
    %45 = arith.truncf %44 : vector<48x128xf32> to vector<48x128xbf16>
    %c0_13 = arith.constant 0 : index
    %c0_14 = arith.constant 0 : index
    %c0_15 = arith.constant 0 : index
    %46 = vector.load %arg7[%c0_13, %c0_14, %c0_15] : memref<1x48x128xbf16, #tpu.memory_space<vmem>>, vector<1x48x128xbf16>
    %47 = vector.shape_cast %46 : vector<1x48x128xbf16> to vector<48x128xbf16>
    %48 = vector.shape_cast %45 : vector<48x128xbf16> to vector<1x48x128xbf16>
    tpu.vector_store %arg7[%c0_13, %c0_14, %c0_15], %48 {strides = array<i32>} : memref<1x48x128xbf16, #tpu.memory_space<vmem>>, vector<1x48x128xbf16>,
    return
  }
  func.func @transform_0(%arg0: i32, %arg1: i32) -> (i32, i32, i32) {
    %c0_i32 = arith.constant 0 : i32
    %c0_i32_0 = arith.constant 0 : i32
    return %arg0, %c0_i32, %arg1 : i32, i32, i32
  }
  func.func @transform_1(%arg0: i32, %arg1: i32) -> (i32, i32, i32) {
    %c0_i32 = arith.constant 0 : i32
    %c0_i32_0 = arith.constant 0 : i32
    return %arg0, %c0_i32, %arg1 : i32, i32, i32
  }
  func.func @transform_2(%arg0: i32, %arg1: i32) -> (i32, i32, i32) {
    %c0_i32 = arith.constant 0 : i32
    %c0_i32_0 = arith.constant 0 : i32
    return %arg0, %c0_i32, %arg1 : i32, i32, i32
  }
  func.func @transform_3(%arg0: i32, %arg1: i32) -> (i32, i32) {
    %c0_i32 = arith.constant 0 : i32
    %c0_i32_0 = arith.constant 0 : i32
    %c0_i32_1 = arith.constant 0 : i32
    return %c0_i32, %c0_i32_0 : i32, i32
  }
  func.func @transform_4(%arg0: i32, %arg1: i32) -> (i32, i32) {
    %c0_i32 = arith.constant 0 : i32
    %c0_i32_0 = arith.constant 0 : i32
    %c0_i32_1 = arith.constant 0 : i32
    return %c0_i32, %c0_i32_0 : i32, i32
  }
  func.func @transform_5(%arg0: i32, %arg1: i32) -> (i32, i32, i32) {
    %c0_i32 = arith.constant 0 : i32
    %c0_i32_0 = arith.constant 0 : i32
    return %arg0, %c0_i32, %arg1 : i32, i32, i32
  }
}

</mosaic_0001>

<llo_original>
// kernel: tile.9
$region0: #{tile.9}
  %s0 = inlined_call_operand.vmem [shape: f32[2,8,16], index: 0, kind: input, shape index: {}]
  %s1 = inlined_call_operand.vmem [shape: f32[2,128], index: 1, kind: output, shape index: {}]
  $region1: #{tile.9} parent=0
    #allocation0 [shape = 'u8[4096]{0}', space=vmem, size = 0x1000, scoped, tag = 'scoped mem for output reshape']
    %s2 = smov 3
    %v3 = vld [vmem:[%s0] ss:$8 sm:%s2]
    %vm4 = vcmask 130048
    %5 = vst.msk [vmem:[#allocation0] sm:$0x3] %vm4, %v3
    %s6 = scalar_lea.vmem %s0, 7
    %s7 = smov 3
    %v8 = vld [vmem:[%s6] ss:$8 sm:%s7]
    %9 = vrot.lane.b32.xlu0 %v8, 112
    %v10 = vpop.permute.xlu0 %9
    %vm11 = vcmask 1048448
    %12 = vst.msk [vmem:[#allocation0] sm:$0x3] %vm11, %v10
    %s13 = scalar_lea.vmem %s0, 6
    %s14 = smov 3
    %v15 = vld [vmem:[%s13] ss:$8 sm:%s14]
    %16 = vrot.lane.b32.xlu0 %v15, 96
    %v17 = vpop.permute.xlu0 %16
    %vm18 = vcmask 917248
    %19 = vst.msk [vmem:[#allocation0] sm:$0x3] %vm18, %v17
    %s20 = scalar_lea.vmem %s0, 5
    %s21 = smov 3
    %v22 = vld [vmem:[%s20] ss:$8 sm:%s21]
    %23 = vrot.lane.b32.xlu0 %v22, 80
    %v24 = vpop.permute.xlu0 %23
    %vm25 = vcmask 786048
    %26 = vst.msk [vmem:[#allocation0] sm:$0x3] %vm25, %v24
    %s27 = scalar_lea.vmem %s0, 4
    %s28 = smov 3
    %v29 = vld [vmem:[%s27] ss:$8 sm:%s28]
    %30 = vrot.lane.b32.xlu0 %v29, 64
    %v31 = vpop.permute.xlu0 %30
    %vm32 = vcmask 654848
    %33 = vst.msk [vmem:[#allocation0] sm:$0x3] %vm32, %v31
    %s34 = scalar_lea.vmem %s0, 3
    %s35 = smov 3
    %v36 = vld [vmem:[%s34] ss:$8 sm:%s35]
    %37 = vrot.lane.b32.xlu0 %v36, 48
    %v38 = vpop.permute.xlu0 %37
    %vm39 = vcmask 523648
    %40 = vst.msk [vmem:[#allocation0] sm:$0x3] %vm39, %v38
    %s41 = scalar_lea.vmem %s0, 2
    %s42 = smov 3
    %v43 = vld [vmem:[%s41] ss:$8 sm:%s42]
    %44 = vrot.lane.b32.xlu0 %v43, 32
    %v45 = vpop.permute.xlu0 %44
    %vm46 = vcmask 392448
    %47 = vst.msk [vmem:[#allocation0] sm:$0x3] %vm46, %v45
    %s48 = scalar_lea.vmem %s0, 1
    %s49 = smov 3
    %v50 = vld [vmem:[%s48] ss:$8 sm:%s49]
    %51 = vrot.lane.b32.xlu0 %v50, 16
    %v52 = vpop.permute.xlu0 %51
    %vm53 = vcmask 261248
    %54 = vst.msk [vmem:[#allocation0] sm:$0x3] %vm53, %v52
    %s56 = sshll.u32 1, 2
    %s57 = ssub.s32 %s56, 1
    %v59 = vld [vmem:[#allocation0] sm:%s57]
    %s60 = sshll.u32 1, 2
    %s61 = ssub.s32 %s60, 1
    %62 = vst [vmem:[%s1] sm:%s61] %v59

// kernel: overlap_patch_embed.1
$region0: #{overlap_patch_embed.1}
  #allocation0 [shape = 'u32[]', space=smem, size = 0x4, offset = 0x4, fixed_abs, tag = 'smem constant byte address 0x4 - core index']
  #allocation1 [shape = 'u32[144,128]{1,0:T(1,128)}', space=vmem, size = 0x12000, scoped, tag = 'internal scratch']
  %s0 = inlined_call_operand.vmem [shape: bf16[2,3,256], index: 0, kind: input, shape index: {}]
  %s1 = inlined_call_operand.vmem [shape: bf16[2,3,256], index: 1, kind: input, shape index: {}]
  %s2 = inlined_call_operand.vmem [shape: bf16[2,3,256], index: 2, kind: input, shape index: {}]
  %s3 = inlined_call_operand.vmem [shape: f32[2,128], index: 3, kind: input, shape index: {}]
  %s4 = inlined_call_operand.vmem [shape: bf16[48,27], index: 4, kind: input, shape index: {}]
  %s5 = inlined_call_operand.vmem [shape: bf16[2,48,256], index: 5, kind: output, shape index: {}]
  %s6 = sld [smem:[#allocation0]]
  $region90: #{overlap_patch_embed.1} parent=0
    _
  %s8 = ssub.s32 1, %s6
  %s9 = scalar_select 0, %s8, %s6
  $region1: #{overlap_patch_embed.1} parent=0
    #allocation2 [shape = 'u8[24576]{0}', space=vmem, size = 0x6000, scoped, tag = 'output window, operand 0']
    loop: start=0, step=1, limit=6
    $region2: #{overlap_patch_embed.1} parent=1 // loop_pre_header
      _
    $region3: #{overlap_patch_embed.1} parent=1 // loop_header
      %s11 = sphi 0, %s15
      %p12 = scmp.ge.s32.totalorder %s11, 6
      %s18 = sphi 0, %s30
      %s19 = sphi 0, %s26
      %s20 = sphi 0, %s18
      %s21 = sphi 0, %s19
      %s22 = sphi 0, %s20
      %s23 = sphi 0, %s21
      %s35 = sphi 0, %s37
      %s38 = sphi 0, %s35
      %s39 = sphi 0, %s38
      %s55 = sphi 0, %s39
      %s63 = sphi 0, %s65
      %s66 = sphi 0, %s63
      %s67 = sphi 0, %s66
      %s83 = sphi 0, %s67
      %s91 = sphi 0, %s93
      %s94 = sphi 0, %s91
      %s95 = sphi 0, %s94
      %s111 = sphi 0, %s95
      %s115 = sphi 0, %s115
      %s117 = sphi 0, %s115
      %s118 = sphi 0, %s117
      %s132 = sphi 0, %s118
      %s136 = sphi 0, %s136
      %s138 = sphi 0, %s136
      %s139 = sphi 0, %s138
      %s153 = sphi 0, %s139
      %s161 = sphi 0, %s163
      %s164 = sphi 0, %s161
      %s165 = sphi 0, %s164
      %s181 = sphi 0, %s165
    $region4: #{overlap_patch_embed.1} parent=1 // loop_header_branch
      %14 = sbr.rel (%p12) target = $region8
    $region5: #{overlap_patch_embed.1} parent=1 // loop_body
      %s16 = ssub.s32 %s11, 1
      %s17 = ssub.s32 %s11, 2
      %s24 = sadd.s32 1, %s19
      %p25 = scmp.ge.s32.totalorder %s24, 2
      %s26 = scalar_select %p25, 0, %s24
      %s27 = sadd.s32 1, %s18
      %s28 = scalar_select %p25, %s27, %s18
      %p29 = scmp.ge.s32.totalorder %s28, 2
      %s30 = scalar_select %p29, 0, %s28
      %s31 = ssub.s32 %s18, %s30
      %s32 = ssub.s32 %s19, %s26
      %s33 = sor.u32 %s31, %s32
      %p34 = scmp.eq.s32.totalorder %s33, 0
      %s36 = sadd.s32 %s35, 1
      %s37 = scalar_select %p34, %s35, %s36
      %p40 = pneg %p34
      %p41 = scmp.eq.s32.totalorder %s11, 3
      %p42 = por %p40, %p41
      %p43 = scmp.ne.s32.totalorder %s35, %s38
      %p44 = scmp.eq.s32.totalorder %s11, 0
      %p45 = por %p43, %p44
      %p46 = scmp.ne.s32.totalorder %s35, %s38
      %p47 = scmp.eq.s32.totalorder %s16, 3
      %p48 = por %p46, %p47
      %p49 = scmp.ne.s32.totalorder %s38, %s39
      %p50 = scmp.eq.s32.totalorder %s16, 0
      %p51 = por %p49, %p50
      %p52 = scmp.ne.s32.totalorder %s38, %s39
      %p53 = scmp.eq.s32.totalorder %s17, 3
      %p54 = por %p52, %p53
      %p56 = scmp.ne.s32.totalorder %s39, %s55
      %p57 = scmp.eq.s32.totalorder %s17, 0
      %p58 = por %p56, %p57
      %s59 = ssub.s32 %s18, %s30
      %s60 = ssub.s32 %s19, %s26
      %s61 = sor.u32 %s59, %s60
      %p62 = scmp.eq.s32.totalorder %s61, 0
      %s64 = sadd.s32 %s63, 1
      %s65 = scalar_select %p62, %s63, %s64
      %p68 = pneg %p62
      %p69 = scmp.eq.s32.totalorder %s11, 3
      %p70 = por %p68, %p69
      %p71 = scmp.ne.s32.totalorder %s63, %s66
      %p72 = scmp.eq.s32.totalorder %s11, 0
      %p73 = por %p71, %p72
      %p74 = scmp.ne.s32.totalorder %s63, %s66
      %p75 = scmp.eq.s32.totalorder %s16, 3
      %p76 = por %p74, %p75
      %p77 = scmp.ne.s32.totalorder %s66, %s67
      %p78 = scmp.eq.s32.totalorder %s16, 0
      %p79 = por %p77, %p78
      %p80 = scmp.ne.s32.totalorder %s66, %s67
      %p81 = scmp.eq.s32.totalorder %s17, 3
      %p82 = por %p80, %p81
      %p84 = scmp.ne.s32.totalorder %s67, %s83
      %p85 = scmp.eq.s32.totalorder %s17, 0
      %p86 = por %p84, %p85
      %s87 = ssub.s32 %s18, %s30
      %s88 = ssub.s32 %s19, %s26
      %s89 = sor.u32 %s87, %s88
      %p90 = scmp.eq.s32.totalorder %s89, 0
      %s92 = sadd.s32 %s91, 1
      %s93 = scalar_select %p90, %s91, %s92
      %p96 = pneg %p90
      %p97 = scmp.eq.s32.totalorder %s11, 3
      %p98 = por %p96, %p97
      %p99 = scmp.ne.s32.totalorder %s91, %s94
      %p100 = scmp.eq.s32.totalorder %s11, 0
      %p101 = por %p99, %p100
      %p102 = scmp.ne.s32.totalorder %s91, %s94
      %p103 = scmp.eq.s32.totalorder %s16, 3
      %p104 = por %p102, %p103
      %p105 = scmp.ne.s32.totalorder %s94, %s95
      %p106 = scmp.eq.s32.totalorder %s16, 0
      %p107 = por %p105, %p106
      %p108 = scmp.ne.s32.totalorder %s94, %s95
      %p109 = scmp.eq.s32.totalorder %s17, 3
      %p110 = por %p108, %p109
      %p112 = scmp.ne.s32.totalorder %s95, %s111
      %p113 = scmp.eq.s32.totalorder %s17, 0
      %p114 = por %p112, %p113
      %s116 = sadd.s32 %s115, 1
      %p119 = scmp.eq.s32.totalorder %s11, 3
      %p120 = scmp.ne.s32.totalorder %s115, %s117
      %p121 = scmp.eq.s32.totalorder %s11, 0
      %p122 = por %p120, %p121
      %p123 = scmp.ne.s32.totalorder %s115, %s117
      %p124 = scmp.eq.s32.totalorder %s16, 3
      %p125 = por %p123, %p124
      %p126 = scmp.ne.s32.totalorder %s117, %s118
      %p127 = scmp.eq.s32.totalorder %s16, 0
      %p128 = por %p126, %p127
      %p129 = scmp.ne.s32.totalorder %s117, %s118
      %p130 = scmp.eq.s32.totalorder %s17, 3
      %p131 = por %p129, %p130
      %p133 = scmp.ne.s32.totalorder %s118, %s132
      %p134 = scmp.eq.s32.totalorder %s17, 0
      %p135 = por %p133, %p134
      %s137 = sadd.s32 %s136, 1
      %p140 = scmp.eq.s32.totalorder %s11, 3
      %p141 = scmp.ne.s32.totalorder %s136, %s138
      %p142 = scmp.eq.s32.totalorder %s11, 0
      %p143 = por %p141, %p142
      %p144 = scmp.ne.s32.totalorder %s136, %s138
      %p145 = scmp.eq.s32.totalorder %s16, 3
      %p146 = por %p144, %p145
      %p147 = scmp.ne.s32.totalorder %s138, %s139
      %p148 = scmp.eq.s32.totalorder %s16, 0
      %p149 = por %p147, %p148
      %p150 = scmp.ne.s32.totalorder %s138, %s139
      %p151 = scmp.eq.s32.totalorder %s17, 3
      %p152 = por %p150, %p151
      %p154 = scmp.ne.s32.totalorder %s139, %s153
      %p155 = scmp.eq.s32.totalorder %s17, 0
      %p156 = por %p154, %p155
      %s157 = ssub.s32 %s18, %s30
      %s158 = ssub.s32 %s19, %s26
      %s159 = sor.u32 %s157, %s158
      %p160 = scmp.eq.s32.totalorder %s159, 0
      %s162 = sadd.s32 %s161, 1
      %s163 = scalar_select %p160, %s161, %s162
      %p166 = pneg %p160
      %p167 = scmp.eq.s32.totalorder %s11, 3
      %p168 = por %p166, %p167
      %p169 = scmp.ne.s32.totalorder %s161, %s164
      %p170 = scmp.eq.s32.totalorder %s11, 0
      %p171 = por %p169, %p170
      %p172 = scmp.ne.s32.totalorder %s161, %s164
      %p173 = scmp.eq.s32.totalorder %s16, 3
      %p174 = por %p172, %p173
      %p175 = scmp.ne.s32.totalorder %s164, %s165
      %p176 = scmp.eq.s32.totalorder %s16, 0
      %p177 = por %p175, %p176
      %p178 = scmp.ne.s32.totalorder %s164, %s165
      %p179 = scmp.eq.s32.totalorder %s17, 3
      %p180 = por %p178, %p179
      %p182 = scmp.ne.s32.totalorder %s165, %s181
      %p183 = scmp.eq.s32.totalorder %s17, 0
      %p184 = por %p182, %p183
      %p185 = scmp.le.s32.totalorder 1, %s11
      %p186 = scmp.lt.s32.totalorder %s11, 5
      %p187 = pnand %p185, %p186
      %p188 = pneg %p187
      // Predicated region
      $region9: #{overlap_patch_embed.1} parent=5 // pred_check
        _
      $region10: #{overlap_patch_embed.1} parent=5 // pred_check_branch
        %190 = sbr.rel (%p187) target = $region12
      $region11: #{overlap_patch_embed.1} parent=5 // pred_region
        %s191 = ssub.s32 %s11, 1
        // Predicated region
        $region13: #{overlap_patch_embed.1} parent=11 // pred_check
          %p192 = pneg %p128
        $region14: #{overlap_patch_embed.1} parent=11 // pred_check_branch
          %194 = sbr.rel (%p192) target = $region16
        $region15: #{overlap_patch_embed.1} parent=11 // pred_region
          _
        $region16: #{overlap_patch_embed.1} parent=11 // pred_fallthru
          _
        // Predicated region
        $region17: #{overlap_patch_embed.1} parent=11 // pred_check
          %p195 = pneg %p149
        $region18: #{overlap_patch_embed.1} parent=11 // pred_check_branch
          %197 = sbr.rel (%p195) target = $region20
        $region19: #{overlap_patch_embed.1} parent=11 // pred_region
          _
        $region20: #{overlap_patch_embed.1} parent=11 // pred_fallthru
          _
      $region12: #{overlap_patch_embed.1} parent=5 // pred_fallthru
        _
      %p198 = scmp.lt.s32.totalorder %s11, 4
      // Predicated region
      $region21: #{overlap_patch_embed.1} parent=5 // pred_check
        %p199 = pneg %p198
      $region22: #{overlap_patch_embed.1} parent=5 // pred_check_branch
        %201 = sbr.rel (%p199) target = $region24
      $region23: #{overlap_patch_embed.1} parent=5 // pred_region
        // Predicated region
        $region25: #{overlap_patch_embed.1} parent=23 // pred_check
          %p202 = pneg %p45
        $region26: #{overlap_patch_embed.1} parent=23 // pred_check_branch
          %204 = sbr.rel (%p202) target = $region28
        $region27: #{overlap_patch_embed.1} parent=23 // pred_region
          %p205 = scmp.lt.s32.totalorder %s18, 1
          %s206 = scalar_select %p205, %s18, 1
          %p207 = scmp.lt.s32.totalorder %s19, 1
          %s208 = scalar_select %p207, %s19, 1
          %s209 = smul.addr %s206, 2
          %s210 = sadd.s32 %s208, %s209
          %s211 = smul.addr %s210, 2
          %s212 = scalar_lea.vmem %s0, %s211
        $region28: #{overlap_patch_embed.1} parent=23 // pred_fallthru
          _
        // Predicated region
        $region29: #{overlap_patch_embed.1} parent=23 // pred_check
          %p213 = pneg %p73
        $region30: #{overlap_patch_embed.1} parent=23 // pred_check_branch
          %215 = sbr.rel (%p213) target = $region32
        $region31: #{overlap_patch_embed.1} parent=23 // pred_region
          %p216 = scmp.lt.s32.totalorder %s18, 1
          %s217 = scalar_select %p216, %s18, 1
          %p218 = scmp.lt.s32.totalorder %s19, 1
          %s219 = scalar_select %p218, %s19, 1
          %s220 = smul.addr %s217, 2
          %s221 = sadd.s32 %s219, %s220
          %s222 = smul.addr %s221, 2
          %s223 = scalar_lea.vmem %s1, %s222
        $region32: #{overlap_patch_embed.1} parent=23 // pred_fallthru
          _
        // Predicated region
        $region33: #{overlap_patch_embed.1} parent=23 // pred_check
          %p224 = pneg %p101
        $region34: #{overlap_patch_embed.1} parent=23 // pred_check_branch
          %226 = sbr.rel (%p224) target = $region36
        $region35: #{overlap_patch_embed.1} parent=23 // pred_region
          %p227 = scmp.lt.s32.totalorder %s18, 1
          %s228 = scalar_select %p227, %s18, 1
          %p229 = scmp.lt.s32.totalorder %s19, 1
          %s230 = scalar_select %p229, %s19, 1
          %s231 = smul.addr %s228, 2
          %s232 = sadd.s32 %s230, %s231
          %s233 = smul.addr %s232, 2
          %s234 = scalar_lea.vmem %s2, %s233
        $region36: #{overlap_patch_embed.1} parent=23 // pred_fallthru
          _
      $region24: #{overlap_patch_embed.1} parent=5 // pred_fallthru
        _
      %p235 = scmp.le.s32.totalorder 1, %s11
      %p236 = scmp.lt.s32.totalorder %s11, 5
      %p237 = pnand %p235, %p236
      %p238 = pneg %p237
      // Predicated region
      $region37: #{overlap_patch_embed.1} parent=5 // pred_check
        _
      $region38: #{overlap_patch_embed.1} parent=5 // pred_check_branch
        %240 = sbr.rel (%p237) target = $region40
      $region39: #{overlap_patch_embed.1} parent=5 // pred_region
        %s241 = ssub.s32 %s11, 1
        %p242 = scmp.lt.s32.totalorder %s20, 1
        %s243 = scalar_select %p242, %s20, 1
        %p244 = scmp.lt.s32.totalorder %s21, 1
        %s245 = scalar_select %p244, %s21, 1
        %s246 = smul.addr %s243, 2
        %s247 = sadd.s32 %s245, %s246
        %s248 = smul.addr %s247, 2
        %s249 = scalar_lea.vmem %s0, %s248
        %p250 = pneg %p51
        %p251 = pneg %p48
        %p252 = scmp.lt.s32.totalorder %s20, 1
        %s253 = scalar_select %p252, %s20, 1
        %p254 = scmp.lt.s32.totalorder %s21, 1
        %s255 = scalar_select %p254, %s21, 1
        %s256 = smul.addr %s253, 2
        %s257 = sadd.s32 %s255, %s256
        %s258 = smul.addr %s257, 2
        %s259 = scalar_lea.vmem %s1, %s258
        %p260 = pneg %p79
        %p261 = pneg %p76
        %p262 = scmp.lt.s32.totalorder %s20, 1
        %s263 = scalar_select %p262, %s20, 1
        %p264 = scmp.lt.s32.totalorder %s21, 1
        %s265 = scalar_select %p264, %s21, 1
        %s266 = smul.addr %s263, 2
        %s267 = sadd.s32 %s265, %s266
        %s268 = smul.addr %s267, 2
        %s269 = scalar_lea.vmem %s2, %s268
        %p270 = pneg %p107
        %p271 = pneg %p104
        %p272 = pneg %p128
        %p273 = pneg %p125
        %p274 = pneg %p149
        %p275 = pneg %p146
        %p276 = pneg %p177
        %p277 = pneg %p174
        %s278 = sand.u32 %s164, 1
        %s279 = sand.u32 %s164, 1
        %s280 = smul.addr %s279, 24
        %s281 = scalar_lea.vmem [#allocation2], %s280
        %p282 = scmp.lt.s32.totalorder %s20, 1
        %s283 = scalar_select %p282, %s20, 1
        %p284 = scmp.lt.s32.totalorder %s21, 1
        %s285 = scalar_select %p284, %s21, 1
        %s286 = smul.addr %s283, 2
        %s287 = sadd.s32 %s285, %s286
        %s288 = smul.addr %s287, 2
        %s289 = scalar_lea.vmem %s0, %s288
        %p290 = scmp.lt.s32.totalorder %s20, 1
        %s291 = scalar_select %p290, %s20, 1
        %p292 = scmp.lt.s32.totalorder %s21, 1
        %s293 = scalar_select %p292, %s21, 1
        %s294 = smul.addr %s291, 2
        %s295 = sadd.s32 %s293, %s294
        %s296 = smul.addr %s295, 2
        %s297 = scalar_lea.vmem %s1, %s296
        %p298 = scmp.lt.s32.totalorder %s20, 1
        %s299 = scalar_select %p298, %s20, 1
        %p300 = scmp.lt.s32.totalorder %s21, 1
        %s301 = scalar_select %p300, %s21, 1
        %s302 = smul.addr %s299, 2
        %s303 = sadd.s32 %s301, %s302
        %s304 = smul.addr %s303, 2
        %s305 = scalar_lea.vmem %s2, %s304
        %v307 = vld [vmem:[%s3] sm:$0x1]
        %v308 = vld [vmem:[%s3 + $0x1] sm:$0x1]
        %v309 = vld [vmem:[%s289] sm:$0x3]
        %v310 = vunpack.c.l.bf16 %v309
        %312 = vrot.lane.b32.xlu0 %v310, 1
        %v313 = vpop.permute.xlu0 %312
        %v315 = vlaneseq
        %v316 = vshrl.u32 %v315, 7
        %v317 = vsub.s32 0, %v316
        %v318 = vrot.slane %v307, %v317
        %v319 = vmul.f32 %v313, %v318
        %320 = vrot.lane.b32.xlu0 %v310, 127
        %v321 = vpop.permute.xlu0 %320
        %v323 = vlaneseq
        %v324 = vshrl.u32 %v323, 7
        %v325 = vsub.s32 0, %v324
        %v326 = vrot.slane %v308, %v325
        %v327 = vmul.f32 %v321, %v326
        %v328 = vld [vmem:[%s297] sm:$0x3]
        %v329 = vunpack.c.l.bf16 %v328
        %331 = vrot.lane.b32.xlu0 %v329, 1
        %v332 = vpop.permute.xlu0 %331
        %v334 = vmul.f32 %v332, %v318
        %335 = vrot.lane.b32.xlu0 %v329, 127
        %v336 = vpop.permute.xlu0 %335
        %v338 = vmul.f32 %v336, %v326
        %v339 = vld [vmem:[%s305] sm:$0x3]
        %v340 = vunpack.c.l.bf16 %v339
        %342 = vrot.lane.b32.xlu0 %v340, 1
        %v343 = vpop.permute.xlu0 %342
        %v345 = vmul.f32 %v343, %v318
        %346 = vrot.lane.b32.xlu0 %v340, 127
        %v347 = vpop.permute.xlu0 %346
        %v349 = vmul.f32 %v347, %v326
        %v350 = vrot.slane %v310, 5
        %v353 = vrot.slane %v327, 2
        %v356 = vrot.slane %v334, 7
        %v358 = vcombine.low %v329, %v329
        %v361 = vrot.slane %v338, 1
        %v364 = vrot.slane %v345, 6
        %v366 = vrot.slane %v340, 3
        %vm368 = vcmask 1042432
        %v369 = vsel %vm368, %v319, %v350
        %vm370 = vcmask 1045504
        %v371 = vsel %vm370, %v369, %v353
        %vm372 = vcmask 1040384
        %v373 = vsel %vm372, %v353, %v356
        %vm374 = vcmask 1043456
        %v375 = vsel %vm374, %v373, %v358
        %vm376 = vcmask 1046528
        %v377 = vsel %vm376, %v375, %v361
        %vm378 = vcmask 1041408
        %v379 = vsel %vm378, %v361, %v364
        %vm380 = vcmask 1044480
        %v381 = vsel %vm380, %v379, %v366
        %v382 = vpack.c.bf16 %v377, %v371
        %v383 = vpack.c.bf16 %v349, %v381
        %v384 = vld [vmem:[%s4] sm:$0xf]
        %v385 = vld [vmem:[%s4 + $0x4] sm:$0xf]
        %v386 = vld [vmem:[%s4 + $0x8] sm:$0xf]
        %v387 = vld [vmem:[%s4 + $0xc] sm:$0xf]
        %v388 = vld [vmem:[%s4 + $0x10] sm:$0xf]
        %v389 = vld [vmem:[%s4 + $0x14] sm:$0xf]
        %v396 = vunpack.c.l.b16 %v384
        %v397 = vunpack.c.l.b16 %v385
        %v398 = vunpack.c.l.b16 %v386
        %v399 = vunpack.c.l.b16 %v387
        %v400 = vunpack.c.l.b16 %v388
        %v401 = vunpack.c.l.b16 %v389
        %v402 = vpack.c.b16 %v397, %v396
        %v403 = vpack.c.b16 %v399, %v398
        %v404 = vpack.c.b16 %v401, %v400
        %vm405 = vcmask 220160
        %v407 = vsel %vm405, %v402, 0
        %v410 = vsel %vm405, %v403, 0
        %v413 = vsel %vm405, %v404, 0
        %v415 = vsel %vm380, 4294967295, 65535
        %v416 = vsel %vm370, %v415, 0
        %v418 = vand.u32 %v383, %v416
        %420 = vmatprep.subr.bf16.mxu0 0
        %421 = vmatpush1.bf16.msra.mxu0 0
        %422 = vmatprep.subr.bf16.mxu0 0
        %423 = vmatpush1.bf16.msra.mxu0 0
        %424 = vmatprep.subr.bf16.mxu0 0
        %425 = vmatpush1.bf16.msra.mxu0 0
        %426 = vmatprep.subr.bf16.mxu0 0
        %427 = vmatpush1.bf16.msra.mxu0 0
        %428 = vmatprep.subr.bf16.mxu0 0
        %429 = vmatpush1.bf16.msra.mxu0 0
        %430 = vmatprep.subr.bf16.mxu0 0
        %431 = vmatpush1.bf16.msra.mxu0 0
        %432 = vmatprep.subr.bf16.mxu0 0
        %433 = vmatpush1.bf16.msra.mxu0 %v418
        %434 = vmatprep.subr.bf16.mxu0 0
        %435 = vmatpush1.bf16.msra.mxu0 %v382
        %436 = vmatprep.subr.bf16.mxu0 0
        %437 = vmatpush2.bf16.msra.mxu0 0
        %438 = vmatprep.subr.bf16.mxu0 0
        %439 = vmatpush2.bf16.msra.mxu0 0
        %440 = vmatprep.subr.bf16.mxu0 0
        %441 = vmatpush2.bf16.msra.mxu0 0
        %442 = vmatprep.subr.bf16.mxu0 0
        %443 = vmatpush2.bf16.msra.mxu0 0
        %444 = vmatprep.subr.bf16.mxu0 0
        %445 = vmatpush2.bf16.msra.mxu0 0
        %446 = vmatprep.subr.bf16.mxu0 0
        %447 = vmatpush2.bf16.msra.mxu0 0
        %448 = vmatprep.subr.bf16.mxu0 0
        %449 = vmatpush2.bf16.msra.mxu0 0
        %450 = vmatprep.subr.bf16.mxu0 0
        %451 = vmatpush2.bf16.msra.mxu0 0
        %452 = vmatprep.mubr.bf16.mxu0 0
        %453 = vmatmul.mubr.bf16.gmra.mxu0 %v407
        %v454 = vpop.f32.mrf.mxu0
        %v455 = vadd.f32 0.0, %v454
        %v456 = vpop.f32.mrf.mxu0
        %v457 = vpop.f32.mrf.mxu0
        %v458 = vadd.f32 0.0, %v457
        %v459 = vpop.f32.mrf.mxu0
        %460 = vmatprep.mubr.bf16.mxu0 0
        %461 = vmatmul.mubr.bf16.gmra.mxu0 %v410
        %v462 = vpop.f32.mrf.mxu0
        %v463 = vadd.f32 0.0, %v462
        %v464 = vpop.f32.mrf.mxu0
        %v465 = vpop.f32.mrf.mxu0
        %v466 = vadd.f32 0.0, %v465
        %v467 = vpop.f32.mrf.mxu0
        %468 = vmatprep.mubr.bf16.mxu0 0
        %469 = vmatmul.mubr.bf16.gmra.mxu0 %v413
        %v470 = vpop.f32.mrf.mxu0
        %v471 = vadd.f32 0.0, %v470
        %v472 = vpop.f32.mrf.mxu0
        %v473 = vpop.f32.mrf.mxu0
        %v474 = vadd.f32 0.0, %v473
        %v475 = vpop.f32.mrf.mxu0
        %476 = vdwg.mxu0
        %v477 = vpack.c.bf16 %v458, %v455
        %v478 = vpack.c.bf16 %v466, %v463
        %v479 = vpack.c.bf16 %v474, %v471
        %v483 = vunpack.c.l.b16 %v477
        %v484 = vunpack.c.h.b16 %v477
        %v485 = vunpack.c.l.b16 %v478
        %v486 = vunpack.c.h.b16 %v478
        %v487 = vunpack.c.l.b16 %v479
        %v488 = vunpack.c.h.b16 %v479
        %v489 = vpack.c.b16 %v483, %v483
        %v490 = vpack.c.b16 %v484, %v484
        %v491 = vpack.c.b16 %v485, %v485
        %v492 = vpack.c.b16 %v486, %v486
        %v493 = vpack.c.b16 %v487, %v487
        %v494 = vpack.c.b16 %v488, %v488
        %501 = vst [vmem:[%s281] sm:$0xf] %v489
        %502 = vst [vmem:[%s281 + $0x4] sm:$0xf] %v490
        %503 = vst [vmem:[%s281 + $0x8] sm:$0xf] %v491
        %504 = vst [vmem:[%s281 + $0xc] sm:$0xf] %v492
        %505 = vst [vmem:[%s281 + $0x10] sm:$0xf] %v493
        %506 = vst [vmem:[%s281 + $0x14] sm:$0xf] %v494
        %s507 = sand.u32 %s164, 1
        %s508 = sand.u32 %s164, 1
        %s509 = smul.addr %s508, 24
        %s510 = scalar_lea.vmem [#allocation2], %s509
        // Predicated region
        $region41: #{overlap_patch_embed.1} parent=39 // pred_check
          %p511 = pneg %p174
        $region42: #{overlap_patch_embed.1} parent=39 // pred_check_branch
          %513 = sbr.rel (%p511) target = $region44
        $region43: #{overlap_patch_embed.1} parent=39 // pred_region
          %s514 = smul.addr %s20, 12
          %s515 = sadd.s32 %s21, %s514
          %s516 = smul.addr %s515, 4
          %s517 = scalar_lea.vmem %s5, %s516
          // Predicated region
          $region45: #{overlap_patch_embed.1} parent=43 // pred_check
            _
          $region46: #{overlap_patch_embed.1} parent=43 // pred_check_branch
            %519 = sbr.rel (0) target = $region48
          $region47: #{overlap_patch_embed.1} parent=43 // pred_region
            // Predicated region
            $region49: #{overlap_patch_embed.1} parent=47 // pred_check
              _
            $region50: #{overlap_patch_embed.1} parent=47 // pred_check_branch
              %521 = sbr.rel target = $region52
            $region51: #{overlap_patch_embed.1} parent=47 // pred_region
              // Predicated region
              $region64: #{overlap_patch_embed.1} parent=51 // pred_check
                _
              $region65: #{overlap_patch_embed.1} parent=51 // pred_check_branch
                %547 = sbr.rel (0) target = $region67
              $region66: #{overlap_patch_embed.1} parent=51 // pred_region
                loop: start=0, step=1, limit=1
                $region68: #{overlap_patch_embed.1} parent=66 // loop_pre_header
                  _
                $region69: #{overlap_patch_embed.1} parent=66 // loop_header
                  %s549 = sphi 0, %s553
                  %p550 = scmp.ge.s32.totalorder %s549, 1
                  %s554 = sphi %s510, %s510
                  %s555 = sphi %s517, %s517
                $region70: #{overlap_patch_embed.1} parent=66 // loop_header_branch
                  %552 = sbr.rel (%p550) target = $region74
                $region71: #{overlap_patch_embed.1} parent=66 // loop_body
                  _
                $region72: #{overlap_patch_embed.1} parent=66 // loop_footer
                  %s553 = sadd.s32 1, %s549
                $region73: #{overlap_patch_embed.1} parent=66 // loop_footer_branch
                  %548 = sbr.rel target = $region69
                $region74: #{overlap_patch_embed.1} parent=66 // loop_exit
                  _
                %s557 = ssub.s32 16, 1
                loop: start=0, step=1, limit=1
                $region75: #{overlap_patch_embed.1} parent=66 // loop_pre_header
                  _
                $region76: #{overlap_patch_embed.1} parent=66 // loop_header
                  %s559 = sphi 0, %s563
                  %p560 = scmp.ge.s32.totalorder %s559, 1
                  %s564 = sphi %s510, %s510
                  %s565 = sphi %s517, %s517
                $region77: #{overlap_patch_embed.1} parent=66 // loop_header_branch
                  %562 = sbr.rel (%p560) target = $region81
                $region78: #{overlap_patch_embed.1} parent=66 // loop_body
                  %v566 = vld [vmem:[%s564] sm:%s557]
                  %567 = vst [vmem:[%s565] sm:%s557] %v566
                  %v568 = vld [vmem:[%s564 + $0x4] sm:%s557]
                  %569 = vst [vmem:[%s565 + $0x8] sm:%s557] %v568
                  %v570 = vld [vmem:[%s564 + $0x8] sm:%s557]
                  %571 = vst [vmem:[%s565 + $0x10] sm:%s557] %v570
                  %v572 = vld [vmem:[%s564 + $0xc] sm:%s557]
                  %573 = vst [vmem:[%s565 + $0x18] sm:%s557] %v572
                  %v574 = vld [vmem:[%s564 + $0x10] sm:%s557]
                  %575 = vst [vmem:[%s565 + $0x20] sm:%s557] %v574
                  %v576 = vld [vmem:[%s564 + $0x14] sm:%s557]
                  %577 = vst [vmem:[%s565 + $0x28] sm:%s557] %v576
                $region79: #{overlap_patch_embed.1} parent=66 // loop_footer
                  %s563 = sadd.s32 1, %s559
                $region80: #{overlap_patch_embed.1} parent=66 // loop_footer_branch
                  %558 = sbr.rel target = $region76
                $region81: #{overlap_patch_embed.1} parent=66 // loop_exit
                  _
              $region67: #{overlap_patch_embed.1} parent=51 // pred_fallthru
                _
            $region52: #{overlap_patch_embed.1} parent=47 // pred_fallthru
              _
            // Predicated region
            $region53: #{overlap_patch_embed.1} parent=47 // pred_check
              _
            $region54: #{overlap_patch_embed.1} parent=47 // pred_check_branch
              %523 = sbr.rel (0) target = $region56
            $region55: #{overlap_patch_embed.1} parent=47 // pred_region
              %s525 = ssub.s32 16, 1
              loop: start=0, step=1, limit=1
              $region57: #{overlap_patch_embed.1} parent=55 // loop_pre_header
                _
              $region58: #{overlap_patch_embed.1} parent=55 // loop_header
                %s527 = sphi 0, %s531
                %p528 = scmp.ge.s32.totalorder %s527, 1
                %s532 = sphi %s510, %s510
                %s533 = sphi %s517, %s517
              $region59: #{overlap_patch_embed.1} parent=55 // loop_header_branch
                %530 = sbr.rel (%p528) target = $region63
              $region60: #{overlap_patch_embed.1} parent=55 // loop_body
                %v534 = vld [vmem:[%s532] sm:%s525]
                %535 = vst [vmem:[%s533] sm:%s525] %v534
                %v536 = vld [vmem:[%s532 + $0x4] sm:%s525]
                %537 = vst [vmem:[%s533 + $0x8] sm:%s525] %v536
                %v538 = vld [vmem:[%s532 + $0x8] sm:%s525]
                %539 = vst [vmem:[%s533 + $0x10] sm:%s525] %v538
                %v540 = vld [vmem:[%s532 + $0xc] sm:%s525]
                %541 = vst [vmem:[%s533 + $0x18] sm:%s525] %v540
                %v542 = vld [vmem:[%s532 + $0x10] sm:%s525]
                %543 = vst [vmem:[%s533 + $0x20] sm:%s525] %v542
                %v544 = vld [vmem:[%s532 + $0x14] sm:%s525]
                %545 = vst [vmem:[%s533 + $0x28] sm:%s525] %v544
              $region61: #{overlap_patch_embed.1} parent=55 // loop_footer
                %s531 = sadd.s32 1, %s527
              $region62: #{overlap_patch_embed.1} parent=55 // loop_footer_branch
                %526 = sbr.rel target = $region58
              $region63: #{overlap_patch_embed.1} parent=55 // loop_exit
                _
            $region56: #{overlap_patch_embed.1} parent=47 // pred_fallthru
              _
          $region48: #{overlap_patch_embed.1} parent=43 // pred_fallthru
            _
          %578 = vnop
        $region44: #{overlap_patch_embed.1} parent=39 // pred_fallthru
          _
      $region40: #{overlap_patch_embed.1} parent=5 // pred_fallthru
        _
      %p579 = scmp.le.s32.totalorder 2, %s11
      // Predicated region
      $region82: #{overlap_patch_embed.1} parent=5 // pred_check
        %p580 = pneg %p579
      $region83: #{overlap_patch_embed.1} parent=5 // pred_check_branch
        %582 = sbr.rel (%p580) target = $region85
      $region84: #{overlap_patch_embed.1} parent=5 // pred_region
        %s583 = ssub.s32 %s11, 2
        // Predicated region
        $region86: #{overlap_patch_embed.1} parent=84 // pred_check
          %p584 = pneg %p180
        $region87: #{overlap_patch_embed.1} parent=84 // pred_check_branch
          %586 = sbr.rel (%p584) target = $region89
        $region88: #{overlap_patch_embed.1} parent=84 // pred_region
          %s587 = sand.u32 %s165, 1
          %s588 = sand.u32 %s165, 1
          %s589 = smul.addr %s588, 24
          %s590 = scalar_lea.vmem [#allocation2], %s589
        $region89: #{overlap_patch_embed.1} parent=84 // pred_fallthru
          _
      $region85: #{overlap_patch_embed.1} parent=5 // pred_fallthru
        _
    $region6: #{overlap_patch_embed.1} parent=1 // loop_footer
      %s15 = sadd.s32 1, %s11
    $region7: #{overlap_patch_embed.1} parent=1 // loop_footer_branch
      %10 = sbr.rel target = $region3
    $region8: #{overlap_patch_embed.1} parent=1 // loop_exit
      _

</llo_original>
